<compile_context>
chip_gen: v7x
topology: tpu7x:2x2x1
jax: 0.10.0
libtpu: 0.0.40
codegen_flags: <defaults>
</compile_context>

<pallas_src>
import jax
import jax.numpy as jnp
from jax import lax
from jax.experimental import pallas as pl
from jax.experimental.pallas import tpu as pltpu


def _round_up(x, m):
    return (x + m - 1) // m * m


def _market_state_kernel(feat_ref, seq_ref,
                         wf_ref, bf_ref,
                         ws_ref, bs_ref,
                         wo_ref, bo_ref,
                         out_ref):
    # Tile shapes:
    #   feat_ref : (TB, F)      seq_ref : (TB, T, F)   (unpadded, streamed)
    #   wf/ws    : (F, Hp) bf16 wo : (Hp, Sp) bf16     (padded once at init)
    #   b*       : (1, Hp)/(1, Sp) f32
    #   out_ref  : (TB, Sp) f32 (lane-dense store; wrapper slices to (B, S))
    TB, T, F = seq_ref.shape

    # ---- Temporal mean pooling: f32 accumulation over fixed T-chunks ----
    TC = min(T, 8)
    n_full = T // TC
    rem = T - n_full * TC

    seq_sum = jnp.zeros((TB, F), jnp.float32)
    if n_full > 0:
        def body(c, acc):
            blk = seq_ref[:, pl.ds(c * TC, TC), :].astype(jnp.float32)
            return acc + jnp.sum(blk, axis=1)
        seq_sum = lax.fori_loop(0, n_full, body, seq_sum, unroll=True)
    if rem > 0:
        tail = seq_ref[:, pl.ds(n_full * TC, rem), :].astype(jnp.float32)
        seq_sum = seq_sum + jnp.sum(tail, axis=1)
    seq_pool = seq_sum * jnp.float32(1.0 / T)            # mean over time (in-kernel)

    feats = feat_ref[...].astype(jnp.float32)

    # ---- Feature branch: bf16 MXU matmul with f32 accumulation + EUP tanh ----
    feat_h = jnp.tanh(
        jnp.dot(feats.astype(wf_ref.dtype), wf_ref[...],
                preferred_element_type=jnp.float32) + bf_ref[...])   # (TB, Hp) f32

    # ---- Sequence branch ----
    seq_h = jnp.tanh(
        jnp.dot(seq_pool.astype(ws_ref.dtype), ws_ref[...],
                preferred_element_type=jnp.float32) + bs_ref[...])   # (TB, Hp) f32

    # ---- Fuse branches and project to (padded) market-state logits ----
    h = feat_h + seq_h                                               # (TB, Hp) f32
    out_ref[...] = (
        jnp.dot(h.astype(wo_ref.dtype), wo_ref[...],
                preferred_element_type=jnp.float32)
        + bo_ref[...]).astype(out_ref.dtype)                         # (TB, Sp)


def _pick_batch_tile(B, T, F, seq_itemsize, *, tb_max=128,
                     stream_budget_bytes=20 << 20):
    """Batch tile: >=2 grid steps when possible, multiple of 8, VMEM-budgeted."""
    if B <= 8:
        return B                      # full-extent block (equals array dim -> legal)
    tb = min(tb_max, _round_up(max(B // 2, 8), 8))
    # Double-buffered streamed inputs must fit a conservative VMEM budget
    # (v7x has only 64 MiB physical / 32 MiB default-scoped VMEM).
    def stream_bytes(t):
        return 2 * (t * T * F * seq_itemsize + t * F * 4)
    while tb > 8 and stream_bytes(tb) > stream_budget_bytes:
        tb -= 8
    return max(tb, 8)


def model_wrapper_forward(features, sequence, params, *, tb_max=128):
    """Pallas equivalent of ModelWrapper.forward -> market_state tensor."""
    B, F = features.shape
    _, T, _ = sequence.shape
    Hp = params["W_f"].shape[1]
    Sp = params["W_o"].shape[1]
    S = params["state_dim"]

    tb = _pick_batch_tile(B, T, F, sequence.dtype.itemsize, tb_max=tb_max)
    grid = (pl.cdiv(B, tb),)

    # Constant parameter blocks: index never changes -> single buffer.
    def const(shape):
        return pl.BlockSpec(shape, lambda i: (0,) * len(shape),
                            pipeline_mode=pl.Buffered(1))

    # Explicit VMEM limit with headroom (streamed inputs double-buffered).
    seq_bytes = 2 * tb * T * F * sequence.dtype.itemsize
    feat_bytes = 2 * tb * F * features.dtype.itemsize
    out_bytes = 2 * tb * Sp * 4
    w_bytes = (2 * F * Hp + Hp * Sp) * 2 + (2 * Hp + Sp) * 4
    vmem_limit = int(min(60 << 20,
                         max(16 << 20,
                             2 * (seq_bytes + feat_bytes + out_bytes + w_bytes))))

    out_p = pl.pallas_call(
        _market_state_kernel,
        out_shape=jax.ShapeDtypeStruct((B, Sp), jnp.float32),
        grid=grid,
        in_specs=[
            pl.BlockSpec((tb, F), lambda i: (i, 0)),        # features (no pad)
            pl.BlockSpec((tb, T, F), lambda i: (i, 0, 0)),  # sequence (no pad, bf16 stream)
            const((F, Hp)),                                 # W_f
            const((1, Hp)),                                 # b_f
            const((F, Hp)),                                 # W_s
            const((1, Hp)),                                 # b_s
            const((Hp, Sp)),                                # W_o
            const((1, Sp)),                                 # b_o
        ],
        out_specs=pl.BlockSpec((tb, Sp), lambda i: (i, 0)),
        compiler_params=pltpu.CompilerParams(
            dimension_semantics=("parallel",),              # megacore split on v7x
            vmem_limit_bytes=vmem_limit),
    )(features, sequence,
      params["W_f"], params["b_f"], params["W_s"], params["b_s"],
      params["W_o"], params["b_o"])

    return out_p[:, :S]


def init_params(key, feat_dim, hidden_dim, state_dim):
    """Synthetic stand-in parameters: padded once to 128 lanes, weights bf16."""
    Hp = _round_up(hidden_dim, 128)
    Sp = _round_up(state_dim, 128)
    k1, k2, k3 = jax.random.split(key, 3)
    scale_f = 1.0 / jnp.sqrt(feat_dim)
    scale_h = 1.0 / jnp.sqrt(hidden_dim)

    def pad2(w, rows, cols):
        return jnp.pad(w, ((0, rows - w.shape[0]), (0, cols - w.shape[1])))

    wf = jax.random.normal(k1, (feat_dim, hidden_dim), jnp.float32) * scale_f
    ws = jax.random.normal(k2, (feat_dim, hidden_dim), jnp.float32) * scale_f
    wo = jax.random.normal(k3, (hidden_dim, state_dim), jnp.float32) * scale_h
    return {
        "W_f": pad2(wf, feat_dim, Hp).astype(jnp.bfloat16),
        "b_f": jnp.zeros((1, Hp), jnp.float32),
        "W_s": pad2(ws, feat_dim, Hp).astype(jnp.bfloat16),   # raw weights; mean is in-kernel
        "b_s": jnp.zeros((1, Hp), jnp.float32),
        "W_o": pad2(wo, Hp, Sp).astype(jnp.bfloat16),
        "b_o": jnp.zeros((1, Sp), jnp.float32),
        "hidden_dim": hidden_dim,
        "state_dim": state_dim,
    }


def _reference_forward(features, sequence, params):
    """Pure-JAX reference mirroring the kernel's math (bf16 inputs, f32 acc)."""
    f32, bf16 = jnp.float32, jnp.bfloat16
    wf = params["W_f"].astype(f32)
    ws = params["W_s"].astype(f32)
    wo = params["W_o"].astype(f32)
    seq_pool = jnp.mean(sequence.astype(f32), axis=1)
    feat_h = jnp.tanh(features.astype(bf16).astype(f32) @ wf + params["b_f"])
    seq_h = jnp.tanh(seq_pool.astype(bf16).astype(f32) @ ws + params["b_s"])
    out = (feat_h + seq_h).astype(bf16).astype(f32) @ wo + params["b_o"]
    return out[:, :params["state_dim"]]


if __name__ == "__main__":
    B, T, F, H, S = 2, 8, 32, 32, 8

    key = jax.random.PRNGKey(0)
    k_feat, k_seq, k_params = jax.random.split(key, 3)

    features = jax.random.normal(k_feat, (B, F), jnp.float32)
    # Dominant HBM traffic (the sequence) streams in bf16; all reductions
    # and matmul accumulation inside the kernel stay in f32.
    sequence = jax.random.normal(k_seq, (B, T, F), jnp.float32).astype(jnp.bfloat16)
    params = init_params(k_params, F, H, S)

    market_state = model_wrapper_forward(features, sequence, params)
    market_state = jax.block_until_ready(market_state)

    ref = _reference_forward(features, sequence, params)
    assert market_state.shape == (B, S)
    err = float(jnp.max(jnp.abs(market_state - ref)))
    assert jnp.allclose(market_state, ref, atol=1e-2, rtol=1e-2), err

    # TODO(synk): the real wrapped "cognitive architecture" model is undefined
    # in the reference; this kernel implements the synthetic stand-in only.
    print("KERNEL_OK")
</pallas_src>

<mosaic_0001>
module attributes {stable_mosaic.version = 11 : i64} {
  func.func @_market_state_kernel(%arg0: i32, %arg1: memref<2x32xf32, #tpu.memory_space<vmem>>, %arg2: memref<2x8x32xbf16, #tpu.memory_space<vmem>>, %arg3: memref<32x128xbf16, #tpu.memory_space<vmem>>, %arg4: memref<1x128xf32, #tpu.memory_space<vmem>>, %arg5: memref<32x128xbf16, #tpu.memory_space<vmem>>, %arg6: memref<1x128xf32, #tpu.memory_space<vmem>>, %arg7: memref<128x128xbf16, #tpu.memory_space<vmem>>, %arg8: memref<1x128xf32, #tpu.memory_space<vmem>>, %arg9: memref<2x128xf32, #tpu.memory_space<vmem>>) attributes {dimension_semantics = [#tpu.dimension_semantics<parallel>], iteration_bounds = array<i64: 1>, scalar_prefetch = 0 : i64, scratch_operands = 0 : i64, tpu.core_type = #tpu.core_type<tc>, window_params = [{transform_indices = @transform_0, window_bounds = array<i64: 2, 32>}, {transform_indices = @transform_1, window_bounds = array<i64: 2, 8, 32>}, {pipeline_mode = #tpu.pipeline_mode<synchronous>, transform_indices = @transform_2, window_bounds = array<i64: 32, 128>}, {pipeline_mode = #tpu.pipeline_mode<synchronous>, transform_indices = @transform_3, window_bounds = array<i64: 1, 128>}, {pipeline_mode = #tpu.pipeline_mode<synchronous>, transform_indices = @transform_4, window_bounds = array<i64: 32, 128>}, {pipeline_mode = #tpu.pipeline_mode<synchronous>, transform_indices = @transform_5, window_bounds = array<i64: 1, 128>}, {pipeline_mode = #tpu.pipeline_mode<synchronous>, transform_indices = @transform_6, window_bounds = array<i64: 128, 128>}, {pipeline_mode = #tpu.pipeline_mode<synchronous>, transform_indices = @transform_7, window_bounds = array<i64: 1, 128>}, {transform_indices = @transform_8, window_bounds = array<i64: 2, 128>}]} {
    %cst = arith.constant 0.000000e+00 : f32
    %0 = vector.broadcast %cst : f32 to vector<2x32xf32>
    %c0_i32 = arith.constant 0 : i32
    %c8_i32 = arith.constant 8 : i32
    %1 = arith.muli %c0_i32, %c8_i32 : i32
    %c0 = arith.constant 0 : index
    %2 = arith.index_cast %1 : i32 to index
    %c0_0 = arith.constant 0 : index
    %3 = vector.load %arg2[%c0, %2, %c0_0] : memref<2x8x32xbf16, #tpu.memory_space<vmem>>, vector<2x8x32xbf16>
    %4 = arith.extf %3 : vector<2x8x32xbf16> to vector<2x8x32xf32>
    %cst_1 = arith.constant dense<0.000000e+00> : vector<2x32xf32>
    %5 = vector.multi_reduction <add>, %4, %cst_1 [1] : vector<2x8x32xf32> to vector<2x32xf32>
    %6 = arith.addf %0, %5 : vector<2x32xf32>
    %c1_i32 = arith.constant 1 : i32
    %cst_2 = arith.constant 1.250000e-01 : f32
    %7 = vector.broadcast %cst_2 : f32 to vector<2x32xf32>
    %8 = arith.mulf %6, %7 : vector<2x32xf32>
    %c0_3 = arith.constant 0 : index
    %c0_4 = arith.constant 0 : index
    %9 = vector.load %arg1[%c0_3, %c0_4] : memref<2x32xf32, #tpu.memory_space<vmem>>, vector<2x32xf32>
    %10 = arith.truncf %9 : vector<2x32xf32> to vector<2x32xbf16>
    %c0_5 = arith.constant 0 : index
    %c0_6 = arith.constant 0 : index
    %11 = vector.load %arg3[%c0_5, %c0_6] : memref<32x128xbf16, #tpu.memory_space<vmem>>, vector<32x128xbf16>
    %cst_7 = arith.constant dense<0.000000e+00> : vector<2x128xf32>
    %12 = tpu.matmul %10, %11, %cst_7 {dimension_numbers = #tpu.dot_dimension_numbers<[1], [0], [0], [1], [0, 0, 1, 1], [], []>} : vector<2x32xbf16>, vector<32x128xbf16>, vector<2x128xf32> -> vector<2x128xf32>
    %c0_8 = arith.constant 0 : index
    %c0_9 = arith.constant 0 : index
    %13 = vector.load %arg4[%c0_8, %c0_9] : memref<1x128xf32, #tpu.memory_space<vmem>>, vector<1x128xf32>
    %14 = vector.broadcast %13 : vector<1x128xf32> to vector<2x128xf32>
    %15 = arith.addf %12, %14 : vector<2x128xf32>
    %16 = math.tanh %15 : vector<2x128xf32>
    %17 = arith.truncf %8 : vector<2x32xf32> to vector<2x32xbf16>
    %c0_10 = arith.constant 0 : index
    %c0_11 = arith.constant 0 : index
    %18 = vector.load %arg5[%c0_10, %c0_11] : memref<32x128xbf16, #tpu.memory_space<vmem>>, vector<32x128xbf16>
    %cst_12 = arith.constant dense<0.000000e+00> : vector<2x128xf32>
    %19 = tpu.matmul %17, %18, %cst_12 {dimension_numbers = #tpu.dot_dimension_numbers<[1], [0], [0], [1], [0, 0, 1, 1], [], []>} : vector<2x32xbf16>, vector<32x128xbf16>, vector<2x128xf32> -> vector<2x128xf32>
    %c0_13 = arith.constant 0 : index
    %c0_14 = arith.constant 0 : index
    %20 = vector.load %arg6[%c0_13, %c0_14] : memref<1x128xf32, #tpu.memory_space<vmem>>, vector<1x128xf32>
    %21 = vector.broadcast %20 : vector<1x128xf32> to vector<2x128xf32>
    %22 = arith.addf %19, %21 : vector<2x128xf32>
    %23 = math.tanh %22 : vector<2x128xf32>
    %24 = arith.addf %16, %23 : vector<2x128xf32>
    %25 = arith.truncf %24 : vector<2x128xf32> to vector<2x128xbf16>
    %c0_15 = arith.constant 0 : index
    %c0_16 = arith.constant 0 : index
    %26 = vector.load %arg7[%c0_15, %c0_16] : memref<128x128xbf16, #tpu.memory_space<vmem>>, vector<128x128xbf16>
    %cst_17 = arith.constant dense<0.000000e+00> : vector<2x128xf32>
    %27 = tpu.matmul %25, %26, %cst_17 {dimension_numbers = #tpu.dot_dimension_numbers<[1], [0], [0], [1], [0, 0, 1, 1], [], []>} : vector<2x128xbf16>, vector<128x128xbf16>, vector<2x128xf32> -> vector<2x128xf32>
    %c0_18 = arith.constant 0 : index
    %c0_19 = arith.constant 0 : index
    %28 = vector.load %arg8[%c0_18, %c0_19] : memref<1x128xf32, #tpu.memory_space<vmem>>, vector<1x128xf32>
    %29 = vector.broadcast %28 : vector<1x128xf32> to vector<2x128xf32>
    %30 = arith.addf %27, %29 : vector<2x128xf32>
    %c0_20 = arith.constant 0 : index
    %c0_21 = arith.constant 0 : index
    %31 = vector.load %arg9[%c0_20, %c0_21] : memref<2x128xf32, #tpu.memory_space<vmem>>, vector<2x128xf32>
    tpu.vector_store %arg9[%c0_20, %c0_21], %30 {strides = array<i32>} : memref<2x128xf32, #tpu.memory_space<vmem>>, vector<2x128xf32>,
    return
  }
  func.func @transform_0(%arg0: i32) -> (i32, i32) {
    %c0_i32 = arith.constant 0 : i32
    %c0_i32_0 = arith.constant 0 : i32
    return %arg0, %c0_i32 : i32, i32
  }
  func.func @transform_1(%arg0: i32) -> (i32, i32, i32) {
    %c0_i32 = arith.constant 0 : i32
    %c0_i32_0 = arith.constant 0 : i32
    %c0_i32_1 = arith.constant 0 : i32
    return %arg0, %c0_i32, %c0_i32_0 : i32, i32, i32
  }
  func.func @transform_2(%arg0: i32) -> (i32, i32) {
    %c0_i32 = arith.constant 0 : i32
    %c0_i32_0 = arith.constant 0 : i32
    %c0_i32_1 = arith.constant 0 : i32
    return %c0_i32, %c0_i32_0 : i32, i32
  }
  func.func @transform_3(%arg0: i32) -> (i32, i32) {
    %c0_i32 = arith.constant 0 : i32
    %c0_i32_0 = arith.constant 0 : i32
    %c0_i32_1 = arith.constant 0 : i32
    return %c0_i32, %c0_i32_0 : i32, i32
  }
  func.func @transform_4(%arg0: i32) -> (i32, i32) {
    %c0_i32 = arith.constant 0 : i32
    %c0_i32_0 = arith.constant 0 : i32
    %c0_i32_1 = arith.constant 0 : i32
    return %c0_i32, %c0_i32_0 : i32, i32
  }
  func.func @transform_5(%arg0: i32) -> (i32, i32) {
    %c0_i32 = arith.constant 0 : i32
    %c0_i32_0 = arith.constant 0 : i32
    %c0_i32_1 = arith.constant 0 : i32
    return %c0_i32, %c0_i32_0 : i32, i32
  }
  func.func @transform_6(%arg0: i32) -> (i32, i32) {
    %c0_i32 = arith.constant 0 : i32
    %c0_i32_0 = arith.constant 0 : i32
    %c0_i32_1 = arith.constant 0 : i32
    return %c0_i32, %c0_i32_0 : i32, i32
  }
  func.func @transform_7(%arg0: i32) -> (i32, i32) {
    %c0_i32 = arith.constant 0 : i32
    %c0_i32_0 = arith.constant 0 : i32
    %c0_i32_1 = arith.constant 0 : i32
    return %c0_i32, %c0_i32_0 : i32, i32
  }
  func.func @transform_8(%arg0: i32) -> (i32, i32) {
    %c0_i32 = arith.constant 0 : i32
    %c0_i32_0 = arith.constant 0 : i32
    return %arg0, %c0_i32 : i32, i32
  }
}

</mosaic_0001>

<llo_original>
// kernel: tpu_custom_call.1
$region0: #{tpu_custom_call.1}
  #allocation0 [shape = 'u32[]', space=smem, size = 0x4, offset = 0x4, fixed_abs, tag = 'smem constant byte address 0x4 - core index']
  #allocation1 [shape = 'u32[144,128]{1,0:T(1,128)}', space=vmem, size = 0x12000, scoped, tag = 'internal scratch']
  %s0 = inlined_call_operand.hbm [shape: f32[2,32], index: 0, kind: input, shape index: {}]
  %s1 = inlined_call_operand.hbm [shape: bf16[2,8,32], index: 1, kind: input, shape index: {}]
  %s2 = inlined_call_operand.hbm [shape: bf16[32,128], index: 2, kind: input, shape index: {}]
  %s3 = inlined_call_operand.vmem [shape: f32[1,128], index: 3, kind: input, shape index: {}]
  %s4 = inlined_call_operand.hbm [shape: bf16[32,128], index: 4, kind: input, shape index: {}]
  %s5 = inlined_call_operand.vmem [shape: f32[1,128], index: 5, kind: input, shape index: {}]
  %s6 = inlined_call_operand.hbm [shape: bf16[128,128], index: 6, kind: input, shape index: {}]
  %s7 = inlined_call_operand.vmem [shape: f32[1,128], index: 7, kind: input, shape index: {}]
  %s8 = inlined_call_operand.hbm [shape: f32[2,128], index: 8, kind: output, shape index: {}]
  %s9 = sld [smem:[#allocation0]]
  $region62: #{tpu_custom_call.1} parent=0
    _
  %s11 = ssub.s32 1, %s9
  %s12 = scalar_select 0, %s11, %s9
  $region1: #{tpu_custom_call.1} parent=0
    #allocation2 [shape = 'u8[1024]{0}', space=vmem, size = 0x400, scoped, tag = 'input window, operand 0, single buffered']
    #allocation3 [shape = 's32[1]{0}', space=sflag, size = 0x4, scoped, tag = 'scoped memory for tpu_custom_call.1']
    #allocation4 [shape = 's32[1]{0}', space=sflag, size = 0x4, scoped, tag = 'scoped memory for tpu_custom_call.1']
    #allocation5 [shape = 'u8[4096]{0}', space=vmem, size = 0x1000, scoped, tag = 'input window, operand 1, single buffered']
    #allocation6 [shape = 's32[1]{0}', space=sflag, size = 0x4, scoped, tag = 'scoped memory for tpu_custom_call.1']
    #allocation7 [shape = 'u8[8192]{0}', space=vmem, size = 0x2000, scoped, tag = 'input window, operand 2, single buffered']
    #allocation8 [shape = 'u8[8192]{0}', space=vmem, size = 0x2000, scoped, tag = 'input window, operand 4, single buffered']
    #allocation9 [shape = 's32[1]{0}', space=sflag, size = 0x4, scoped, tag = 'scoped memory for tpu_custom_call.1']
    #allocation10 [shape = 'u8[32768]{0}', space=vmem, size = 0x8000, scoped, tag = 'input window, operand 6, single buffered']
    #allocation11 [shape = 'u8[1024]{0}', space=vmem, size = 0x400, scoped, tag = 'output window, operand 0, single buffered']
    %13 = vsyncpa [#allocation3], 0
    %14 = vsyncpa [#allocation6], 0
    %15 = vsyncpa [#allocation9], 0
    %16 = vsyncpa [#allocation4], 0
    // Predicated region
    $region2: #{tpu_custom_call.1} parent=1 // pred_check
      _
    $region3: #{tpu_custom_call.1} parent=1 // pred_check_branch
      %18 = sbr.rel (0) target = $region5
    $region4: #{tpu_custom_call.1} parent=1 // pred_region
      %s20 = ssub.s32 32, 32
      %21 = vsyncadd [#allocation3], %s20
      %s23 = sshll.u32 [#allocation2], 4
      %s24 = int_to_ptr.vmem [resolvable:$true] %s23
      %26 = dma.hbm_to_vmem [thread:$0]  %s0, 32, %s24, [#allocation3]
    $region5: #{tpu_custom_call.1} parent=1 // pred_fallthru
      _
    // Predicated region
    $region6: #{tpu_custom_call.1} parent=1 // pred_check
      _
    $region7: #{tpu_custom_call.1} parent=1 // pred_check_branch
      %28 = sbr.rel (0) target = $region9
    $region8: #{tpu_custom_call.1} parent=1 // pred_region
      %s30 = ssub.s32 128, 128
      %31 = vsyncadd [#allocation6], %s30
      %s32 = sshll.u32 [#allocation5], 4
      %s33 = int_to_ptr.vmem [resolvable:$true] %s32
      %38 = dma.hbm_to_vmem [thread:$0]  %s1, 128, %s33, [#allocation6], 64, 64, 4
    $region9: #{tpu_custom_call.1} parent=1 // pred_fallthru
      _
    // Predicated region
    $region10: #{tpu_custom_call.1} parent=1 // pred_check
      _
    $region11: #{tpu_custom_call.1} parent=1 // pred_check_branch
      %40 = sbr.rel (0) target = $region13
    $region12: #{tpu_custom_call.1} parent=1 // pred_region
      %s42 = ssub.s32 256, 256
      %43 = vsyncadd [#allocation6], %s42
      %s44 = sshll.u32 [#allocation7], 4
      %s45 = int_to_ptr.vmem [resolvable:$true] %s44
      %50 = dma.hbm_to_vmem [thread:$0]  %s2, 256, %s45, [#allocation6], 64, 64, 4
    $region13: #{tpu_custom_call.1} parent=1 // pred_fallthru
      _
    // Predicated region
    $region14: #{tpu_custom_call.1} parent=1 // pred_check
      _
    $region15: #{tpu_custom_call.1} parent=1 // pred_check_branch
      %52 = sbr.rel (0) target = $region17
    $region16: #{tpu_custom_call.1} parent=1 // pred_region
      _
    $region17: #{tpu_custom_call.1} parent=1 // pred_fallthru
      _
    // Predicated region
    $region18: #{tpu_custom_call.1} parent=1 // pred_check
      _
    $region19: #{tpu_custom_call.1} parent=1 // pred_check_branch
      %54 = sbr.rel (0) target = $region21
    $region20: #{tpu_custom_call.1} parent=1 // pred_region
      %s56 = ssub.s32 256, 256
      %57 = vsyncadd [#allocation9], %s56
      %s58 = sshll.u32 [#allocation8], 4
      %s59 = int_to_ptr.vmem [resolvable:$true] %s58
      %64 = dma.hbm_to_vmem [thread:$0]  %s4, 256, %s59, [#allocation9], 64, 64, 4
    $region21: #{tpu_custom_call.1} parent=1 // pred_fallthru
      _
    // Predicated region
    $region22: #{tpu_custom_call.1} parent=1 // pred_check
      _
    $region23: #{tpu_custom_call.1} parent=1 // pred_check_branch
      %66 = sbr.rel (0) target = $region25
    $region24: #{tpu_custom_call.1} parent=1 // pred_region
      _
    $region25: #{tpu_custom_call.1} parent=1 // pred_fallthru
      _
    // Predicated region
    $region26: #{tpu_custom_call.1} parent=1 // pred_check
      _
    $region27: #{tpu_custom_call.1} parent=1 // pred_check_branch
      %68 = sbr.rel (0) target = $region29
    $region28: #{tpu_custom_call.1} parent=1 // pred_region
      %s70 = ssub.s32 1024, 1024
      %71 = vsyncadd [#allocation9], %s70
      %s72 = sshll.u32 [#allocation10], 4
      %s73 = int_to_ptr.vmem [resolvable:$true] %s72
      %78 = dma.hbm_to_vmem [thread:$0]  %s6, 1024, %s73, [#allocation9], 64, 64, 4
    $region29: #{tpu_custom_call.1} parent=1 // pred_fallthru
      _
    // Predicated region
    $region30: #{tpu_custom_call.1} parent=1 // pred_check
      _
    $region31: #{tpu_custom_call.1} parent=1 // pred_check_branch
      %80 = sbr.rel (0) target = $region33
    $region32: #{tpu_custom_call.1} parent=1 // pred_region
      _
    $region33: #{tpu_custom_call.1} parent=1 // pred_fallthru
      _
    // Predicated region
    $region34: #{tpu_custom_call.1} parent=1 // pred_check
      _
    $region35: #{tpu_custom_call.1} parent=1 // pred_check_branch
      %82 = sbr.rel (0) target = $region37
    $region36: #{tpu_custom_call.1} parent=1 // pred_region
      %83 = dma.done [#allocation3], 32
    $region37: #{tpu_custom_call.1} parent=1 // pred_fallthru
      _
    // Predicated region
    $region38: #{tpu_custom_call.1} parent=1 // pred_check
      _
    $region39: #{tpu_custom_call.1} parent=1 // pred_check_branch
      %85 = sbr.rel (0) target = $region41
    $region40: #{tpu_custom_call.1} parent=1 // pred_region
      %86 = dma.done [#allocation6], 128
    $region41: #{tpu_custom_call.1} parent=1 // pred_fallthru
      _
    // Predicated region
    $region42: #{tpu_custom_call.1} parent=1 // pred_check
      _
    $region43: #{tpu_custom_call.1} parent=1 // pred_check_branch
      %88 = sbr.rel (0) target = $region45
    $region44: #{tpu_custom_call.1} parent=1 // pred_region
      %89 = dma.done [#allocation6], 256
    $region45: #{tpu_custom_call.1} parent=1 // pred_fallthru
      _
    // Predicated region
    $region46: #{tpu_custom_call.1} parent=1 // pred_check
      _
    $region47: #{tpu_custom_call.1} parent=1 // pred_check_branch
      %91 = sbr.rel (0) target = $region49
    $region48: #{tpu_custom_call.1} parent=1 // pred_region
      %92 = dma.done [#allocation9], 256
    $region49: #{tpu_custom_call.1} parent=1 // pred_fallthru
      _
    // Predicated region
    $region50: #{tpu_custom_call.1} parent=1 // pred_check
      _
    $region51: #{tpu_custom_call.1} parent=1 // pred_check_branch
      %94 = sbr.rel (0) target = $region53
    $region52: #{tpu_custom_call.1} parent=1 // pred_region
      %95 = dma.done [#allocation9], 1024
    $region53: #{tpu_custom_call.1} parent=1 // pred_fallthru
      _
    %v97 = vld [vmem:[#allocation5] sm:$0xf]
    %v98 = vld [vmem:[#allocation5 + $0x4] sm:$0xf]
    %v99 = vunpack.c.l.bf16 %v97
    %v100 = vunpack.c.l.bf16 %v98
    %vm101 = vcmask 261120
    %v102 = vsel %vm101, %v99, 0.0
    %v103 = vrot.slane %v102, 4
    %v104 = vadd.f32 %v102, %v103
    %v105 = vrot.slane %v104, 2
    %v106 = vadd.f32 %v104, %v105
    %v107 = vrot.slane %v106, 1
    %v108 = vadd.f32 %v106, %v107
    %v109 = vsel %vm101, %v100, 0.0
    %v110 = vrot.slane %v109, 4
    %v111 = vadd.f32 %v109, %v110
    %v112 = vrot.slane %v111, 2
    %v113 = vadd.f32 %v111, %v112
    %v114 = vrot.slane %v113, 1
    %v115 = vadd.f32 %v113, %v114
    %v116 = vadd.f32 %v108, 0.0
    %v117 = vadd.f32 %v115, 0.0
    %v118 = vmul.f32 %v116, 0.125
    %v119 = vmul.f32 %v117, 0.125
    %v120 = vld [vmem:[#allocation2] sm:$0x3]
    %v121 = vpack.c.bf16 %v120, %v120
    %v122 = vld [vmem:[#allocation7] sm:$0xf]
    %v123 = vld [vmem:[#allocation7 + $0x4] sm:$0xf]
    %v124 = vld [vmem:[#allocation7 + $0x8] sm:$0xf]
    %v125 = vld [vmem:[#allocation7 + $0xc] sm:$0xf]
    %v126 = vld [vmem:[%s3] sm:$0x1]
    %v128 = vlaneseq
    %v129 = vshrl.u32 %v128, 7
    %v130 = vsub.s32 0, %v129
    %v131 = vrot.slane %v126, %v130
    %v137 = vunpack.c.l.b16 %v122
    %v138 = vunpack.c.l.b16 %v123
    %v139 = vunpack.c.l.b16 %v124
    %v140 = vunpack.c.l.b16 %v125
    %v141 = vpack.c.b16 %v138, %v137
    %v142 = vpack.c.b16 %v140, %v139
    %v146 = vsel %vm101, %v121, 0
    %148 = vmatprep.subr.bf16.mxu0 0
    %149 = vmatpush1.bf16.msra.mxu0 %v141
    %150 = vmatprep.subr.bf16.mxu0 0
    %151 = vmatpush1.bf16.msra.mxu0 %v142
    %152 = vmatprep.subr.bf16.mxu0 0
    %153 = vmatpush1.bf16.msra.mxu0 0
    %154 = vmatprep.subr.bf16.mxu0 0
    %155 = vmatpush1.bf16.msra.mxu0 0
    %156 = vmatprep.subr.bf16.mxu0 0
    %157 = vmatpush1.bf16.msra.mxu0 0
    %158 = vmatprep.subr.bf16.mxu0 0
    %159 = vmatpush1.bf16.msra.mxu0 0
    %160 = vmatprep.subr.bf16.mxu0 0
    %161 = vmatpush1.bf16.msra.mxu0 0
    %162 = vmatprep.subr.bf16.mxu0 0
    %163 = vmatpush1.bf16.msra.mxu0 0
    %164 = vmatprep.subr.bf16.mxu0 0
    %165 = vmatpush1.bf16.msra.mxu0 0
    %166 = vmatprep.subr.bf16.mxu0 0
    %167 = vmatpush1.bf16.msra.mxu0 0
    %168 = vmatprep.subr.bf16.mxu0 0
    %169 = vmatpush1.bf16.msra.mxu0 0
    %170 = vmatprep.subr.bf16.mxu0 0
    %171 = vmatpush1.bf16.msra.mxu0 0
    %172 = vmatprep.subr.bf16.mxu0 0
    %173 = vmatpush1.bf16.msra.mxu0 0
    %174 = vmatprep.subr.bf16.mxu0 0
    %175 = vmatpush1.bf16.msra.mxu0 0
    %176 = vmatprep.subr.bf16.mxu0 0
    %177 = vmatpush1.bf16.msra.mxu0 0
    %178 = vmatprep.subr.bf16.mxu0 0
    %179 = vmatpush1.bf16.msra.mxu0 0
    %180 = vmatprep.mubr.bf16.mxu0 0
    %181 = vmatmul.mubr.bf16.gmra.mrb[0].mxu0 %v146
    %v182 = vpop.f32.mrb[0].mxu0
    %v183 = vadd.f32 %v131, %v182
    %v184 = vpop.f32.mrb[0].mxu0
    %v185 = vpop.f32.mrb[0].mxu0
    %v186 = vpop.f32.mrb[0].mxu0
    %187 = vdwg.mxu0
    %v188 = vtanh.pop %v183
    %v189 = vpack.c.bf16 %v118, %v118
    %v190 = vpack.c.bf16 %v119, %v119
    %v191 = vld [vmem:[#allocation8] sm:$0xf]
    %v192 = vld [vmem:[#allocation8 + $0x4] sm:$0xf]
    %v193 = vld [vmem:[#allocation8 + $0x8] sm:$0xf]
    %v194 = vld [vmem:[#allocation8 + $0xc] sm:$0xf]
    %v195 = vld [vmem:[%s5] sm:$0x1]
    %v197 = vlaneseq
    %v198 = vshrl.u32 %v197, 7
    %v199 = vsub.s32 0, %v198
    %v200 = vrot.slane %v195, %v199
    %v204 = vunpack.c.l.b16 %v189
    %v205 = vunpack.c.l.b16 %v190
    %vm206 = vcmask 1041409
    %v207 = vsel %vm206, %v205, %v204
    %v208 = vpack.c.b16 %v207, %v207
    %v213 = vunpack.c.l.b16 %v191
    %v214 = vunpack.c.l.b16 %v192
    %v215 = vunpack.c.l.b16 %v193
    %v216 = vunpack.c.l.b16 %v194
    %v217 = vpack.c.b16 %v214, %v213
    %v218 = vpack.c.b16 %v216, %v215
    %v222 = vsel %vm101, %v208, 0
    %224 = vmatprep.subr.bf16.mxu0 0
    %225 = vmatpush1.bf16.msra.mxu0 %v217
    %226 = vmatprep.subr.bf16.mxu0 0
    %227 = vmatpush1.bf16.msra.mxu0 %v218
    %228 = vmatprep.subr.bf16.mxu0 0
    %229 = vmatpush1.bf16.msra.mxu0 0
    %230 = vmatprep.subr.bf16.mxu0 0
    %231 = vmatpush1.bf16.msra.mxu0 0
    %232 = vmatprep.subr.bf16.mxu0 0
    %233 = vmatpush1.bf16.msra.mxu0 0
    %234 = vmatprep.subr.bf16.mxu0 0
    %235 = vmatpush1.bf16.msra.mxu0 0
    %236 = vmatprep.subr.bf16.mxu0 0
    %237 = vmatpush1.bf16.msra.mxu0 0
    %238 = vmatprep.subr.bf16.mxu0 0
    %239 = vmatpush1.bf16.msra.mxu0 0
    %240 = vmatprep.subr.bf16.mxu0 0
    %241 = vmatpush1.bf16.msra.mxu0 0
    %242 = vmatprep.subr.bf16.mxu0 0
    %243 = vmatpush1.bf16.msra.mxu0 0
    %244 = vmatprep.subr.bf16.mxu0 0
    %245 = vmatpush1.bf16.msra.mxu0 0
    %246 = vmatprep.subr.bf16.mxu0 0
    %247 = vmatpush1.bf16.msra.mxu0 0
    %248 = vmatprep.subr.bf16.mxu0 0
    %249 = vmatpush1.bf16.msra.mxu0 0
    %250 = vmatprep.subr.bf16.mxu0 0
    %251 = vmatpush1.bf16.msra.mxu0 0
    %252 = vmatprep.subr.bf16.mxu0 0
    %253 = vmatpush1.bf16.msra.mxu0 0
    %254 = vmatprep.subr.bf16.mxu0 0
    %255 = vmatpush1.bf16.msra.mxu0 0
    %256 = vmatprep.mubr.bf16.mxu0 0
    %257 = vmatmul.mubr.bf16.gmra.mrb[0].mxu0 %v222
    %v258 = vpop.f32.mrb[0].mxu0
    %v259 = vadd.f32 %v200, %v258
    %v260 = vpop.f32.mrb[0].mxu0
    %v261 = vpop.f32.mrb[0].mxu0
    %v262 = vpop.f32.mrb[0].mxu0
    %263 = vdwg.mxu0
    %v264 = vtanh.pop %v259
    %v265 = vadd.f32 %v188, %v264
    %v266 = vpack.c.bf16 %v265, %v265
    %v267 = vld [vmem:[#allocation10] sm:$0xf]
    %v268 = vld [vmem:[#allocation10 + $0x4] sm:$0xf]
    %v269 = vld [vmem:[#allocation10 + $0x8] sm:$0xf]
    %v270 = vld [vmem:[#allocation10 + $0xc] sm:$0xf]
    %v271 = vld [vmem:[#allocation10 + $0x10] sm:$0xf]
    %v272 = vld [vmem:[#allocation10 + $0x14] sm:$0xf]
    %v273 = vld [vmem:[#allocation10 + $0x18] sm:$0xf]
    %v274 = vld [vmem:[#allocation10 + $0x1c] sm:$0xf]
    %v275 = vld [vmem:[#allocation10 + $0x20] sm:$0xf]
    %v276 = vld [vmem:[#allocation10 + $0x24] sm:$0xf]
    %v277 = vld [vmem:[#allocation10 + $0x28] sm:$0xf]
    %v278 = vld [vmem:[#allocation10 + $0x2c] sm:$0xf]
    %v279 = vld [vmem:[#allocation10 + $0x30] sm:$0xf]
    %v280 = vld [vmem:[#allocation10 + $0x34] sm:$0xf]
    %v281 = vld [vmem:[#allocation10 + $0x38] sm:$0xf]
    %v282 = vld [vmem:[#allocation10 + $0x3c] sm:$0xf]
    %v283 = vld [vmem:[%s7] sm:$0x1]
    %v285 = vlaneseq
    %v286 = vshrl.u32 %v285, 7
    %v287 = vsub.s32 0, %v286
    %v288 = vrot.slane %v283, %v287
    %v306 = vunpack.c.l.b16 %v267
    %v307 = vunpack.c.l.b16 %v268
    %v308 = vunpack.c.l.b16 %v269
    %v309 = vunpack.c.l.b16 %v270
    %v310 = vunpack.c.l.b16 %v271
    %v311 = vunpack.c.l.b16 %v272
    %v312 = vunpack.c.l.b16 %v273
    %v313 = vunpack.c.l.b16 %v274
    %v314 = vunpack.c.l.b16 %v275
    %v315 = vunpack.c.l.b16 %v276
    %v316 = vunpack.c.l.b16 %v277
    %v317 = vunpack.c.l.b16 %v278
    %v318 = vunpack.c.l.b16 %v279
    %v319 = vunpack.c.l.b16 %v280
    %v320 = vunpack.c.l.b16 %v281
    %v321 = vunpack.c.l.b16 %v282
    %v322 = vpack.c.b16 %v307, %v306
    %v323 = vpack.c.b16 %v309, %v308
    %v324 = vpack.c.b16 %v311, %v310
    %v325 = vpack.c.b16 %v313, %v312
    %v326 = vpack.c.b16 %v315, %v314
    %v327 = vpack.c.b16 %v317, %v316
    %v328 = vpack.c.b16 %v319, %v318
    %v329 = vpack.c.b16 %v321, %v320
    %338 = vmatprep.subr.bf16.mxu0 0
    %339 = vmatpush1.bf16.msra.mxu0 %v322
    %340 = vmatprep.subr.bf16.mxu0 0
    %341 = vmatpush1.bf16.msra.mxu0 %v323
    %342 = vmatprep.subr.bf16.mxu0 0
    %343 = vmatpush1.bf16.msra.mxu0 %v324
    %344 = vmatprep.subr.bf16.mxu0 0
    %345 = vmatpush1.bf16.msra.mxu0 %v325
    %346 = vmatprep.subr.bf16.mxu0 0
    %347 = vmatpush1.bf16.msra.mxu0 %v326
    %348 = vmatprep.subr.bf16.mxu0 0
    %349 = vmatpush1.bf16.msra.mxu0 %v327
    %350 = vmatprep.subr.bf16.mxu0 0
    %351 = vmatpush1.bf16.msra.mxu0 %v328
    %352 = vmatprep.subr.bf16.mxu0 0
    %353 = vmatpush1.bf16.msra.mxu0 %v329
    %354 = vmatprep.subr.bf16.mxu0 0
    %355 = vmatpush1.bf16.msra.mxu0 0
    %356 = vmatprep.subr.bf16.mxu0 0
    %357 = vmatpush1.bf16.msra.mxu0 0
    %358 = vmatprep.subr.bf16.mxu0 0
    %359 = vmatpush1.bf16.msra.mxu0 0
    %360 = vmatprep.subr.bf16.mxu0 0
    %361 = vmatpush1.bf16.msra.mxu0 0
    %362 = vmatprep.subr.bf16.mxu0 0
    %363 = vmatpush1.bf16.msra.mxu0 0
    %364 = vmatprep.subr.bf16.mxu0 0
    %365 = vmatpush1.bf16.msra.mxu0 0
    %366 = vmatprep.subr.bf16.mxu0 0
    %367 = vmatpush1.bf16.msra.mxu0 0
    %368 = vmatprep.subr.bf16.mxu0 0
    %369 = vmatpush1.bf16.msra.mxu0 0
    %370 = vmatprep.mubr.bf16.mxu0 0
    %371 = vmatmul.mubr.bf16.gmra.mrb[0].mxu0 %v266
    %v372 = vpop.f32.mrb[0].mxu0
    %v373 = vadd.f32 %v288, %v372
    %v374 = vpop.f32.mrb[0].mxu0
    %v375 = vpop.f32.mrb[0].mxu0
    %v376 = vpop.f32.mrb[0].mxu0
    %377 = vdwg.mxu0
    %378 = vst [vmem:[#allocation11] sm:$0x3] %v373
    // Predicated region
    $region54: #{tpu_custom_call.1} parent=1 // pred_check
      _
    $region55: #{tpu_custom_call.1} parent=1 // pred_check_branch
      %380 = sbr.rel (0) target = $region57
    $region56: #{tpu_custom_call.1} parent=1 // pred_region
      %s382 = ssub.s32 32, 32
      %383 = vsyncadd [#allocation4], %s382
      %s385 = sshll.u32 [#allocation11], 4
      %s386 = int_to_ptr.vmem [resolvable:$true] %s385
      %388 = dma.vmem_to_hbm [thread:$0]  %s386, 32, %s8, [#allocation4]
    $region57: #{tpu_custom_call.1} parent=1 // pred_fallthru
      _
    // Predicated region
    $region58: #{tpu_custom_call.1} parent=1 // pred_check
      _
    $region59: #{tpu_custom_call.1} parent=1 // pred_check_branch
      %390 = sbr.rel (0) target = $region61
    $region60: #{tpu_custom_call.1} parent=1 // pred_region
      %391 = dma.done [#allocation4], 32
    $region61: #{tpu_custom_call.1} parent=1 // pred_fallthru
      _
    %392 = vsyncpa [#allocation3], 1
    %393 = vsyncpa [#allocation6], 1
    %394 = vsyncpa [#allocation9], 1
    %395 = vsyncpa [#allocation4], 1

</llo_original>
